<compile_context>
chip_gen: v6e
topology: v6e:2x2x1
jax: 0.10.0
libtpu: 0.0.40
codegen_flags: <defaults>
</compile_context>

<pallas_src>
import functools
from typing import Any, NamedTuple

import jax
import jax.numpy as jnp
from jax.experimental import pallas as pl
from jax.experimental.pallas import tpu as pltpu


LANE = 128                          # lane width: feature dims padded to multiples
MAX_BATCH_TILE = 1024               # M tile upper bound (review: M >= 256 ideal)
VMEM_BUDGET = 44 * 1024 * 1024      # fused-path sizing budget (v7x: 64 MiB/TC physical)
PARAM_BUDGET = 36 * 1024 * 1024     # max resident padded parameter bytes per pallas_call
MIN_VMEM_LIMIT = 32 * 1024 * 1024
MAX_VMEM_LIMIT = 56 * 1024 * 1024


def _round_up(n: int, m: int) -> int:
    return ((n + m - 1) // m) * m


def _cdiv(a: int, b: int) -> int:
    return -(-a // b)


def _sublane(dtype) -> int:
    # second-to-last-dim granularity: 8 rows of 32-bit; packed dtypes need more
    return 8 * max(1, 4 // jnp.dtype(dtype).itemsize)


# ----------------------------------------------------------------------------
# Fused MLP kernel: refs = (x, W1, b1, W2, b2, ..., WN, bN, out)
# x/W in compute dtype (f32 or bf16); bias add + sigmoid in f32; MXU acc f32.
# ----------------------------------------------------------------------------
def _fused_mlp_kernel(*refs, num_layers: int, final_sigmoid: bool):
    x_ref = refs[0]
    o_ref = refs[-1]

    h = x_ref[...]                                     # (tb, Din_pad) compute dtype
    for l in range(num_layers):
        w = refs[1 + 2 * l][...]                       # (Din_pad, Dout_pad)
        b = refs[2 + 2 * l][...]                       # (1, Dout_pad) f32
        acc = jnp.dot(h, w, preferred_element_type=jnp.float32) + b
        if l != num_layers - 1 or final_sigmoid:
            acc = jax.nn.sigmoid(acc)                  # f32 (exp on EUP)
            h = acc.astype(w.dtype)                    # back to compute dtype for MXU
        else:
            h = acc
    o_ref[...] = h.astype(o_ref.dtype)


# ----------------------------------------------------------------------------
# One-time parameter preparation (pad + cast hoisted out of the forward path).
# ----------------------------------------------------------------------------
class PreparedMlp(NamedTuple):
    dims: tuple          # true feature dims (D0, D1, ..., DL)
    dims_p: tuple        # lane-padded feature dims
    wbs: tuple           # tuple of (W_pad, b_pad) per layer
    groups: tuple        # (lo, hi) layer ranges, one fused pallas_call each
    compute_dtype: Any


def prepare_mlp_params(params, input_size, compute_dtype=jnp.float32):
    dims = [int(input_size)] + [int(w.shape[1]) for (w, _) in params]
    dims_p = [_round_up(d, LANE) for d in dims]
    csize = jnp.dtype(compute_dtype).itemsize

    wbs, layer_bytes = [], []
    for l, (w, b) in enumerate(params):
        assert w.shape == (dims[l], dims[l + 1])
        wp = jnp.zeros((dims_p[l], dims_p[l + 1]), compute_dtype)
        wp = wp.at[: dims[l], : dims[l + 1]].set(w.astype(compute_dtype))
        bp = jnp.zeros((1, dims_p[l + 1]), jnp.float32)
        bp = bp.at[:, : dims[l + 1]].set(b.astype(jnp.float32)[None, :])
        wbs.append((wp, bp))
        # bias occupies a full (8, Dout_pad) f32 sublane group in VMEM
        layer_bytes.append(dims_p[l] * dims_p[l + 1] * csize + 8 * dims_p[l + 1] * 4)

    # Greedy grouping so resident params per call fit the VMEM budget (v7x guard).
    # TODO(synk): a single layer larger than PARAM_BUDGET would need a K/N-tiled
    # weight pipeline (pl.ANY + emit_pipeline); it still gets its own group here.
    groups, start, acc = [], 0, 0
    for l, nb in enumerate(layer_bytes):
        if l > start and acc + nb > PARAM_BUDGET:
            groups.append((start, l))
            start, acc = l, 0
        acc += nb
    groups.append((start, len(layer_bytes)))

    return PreparedMlp(tuple(dims), tuple(dims_p), tuple(wbs), tuple(groups),
                       compute_dtype)


def _group_param_bytes(prepared: PreparedMlp, lo: int, hi: int) -> int:
    csize = jnp.dtype(prepared.compute_dtype).itemsize
    return sum(prepared.dims_p[l] * prepared.dims_p[l + 1] * csize
               + 8 * prepared.dims_p[l + 1] * 4 for l in range(lo, hi))


def _choose_batch_tile(B, sub, per_row_bytes, resident_param_bytes):
    """Pick (tb, B_pad) bounding both VMEM footprint and padding waste."""
    B_sub = _round_up(B, sub)
    avail = max(VMEM_BUDGET - resident_param_bytes, 2 * 1024 * 1024)
    tb_vmem = max(sub, (avail // max(per_row_bytes, 1)) // sub * sub)
    tb_cap = max(sub, min(MAX_BATCH_TILE, tb_vmem))
    n_tiles = _cdiv(B_sub, tb_cap)
    tb = _round_up(_cdiv(B_sub, n_tiles), sub)       # even split -> waste <= 1 sublane group/tile
    n_tiles = _cdiv(B_sub, tb)
    # v7x: with a 1-step grid the "parallel" axis shards nothing; split so the
    # second TensorCore gets work whenever the batch allows it.
    if n_tiles == 1 and tb >= 2 * sub:
        tb = _round_up(_cdiv(tb, 2), sub)
        n_tiles = _cdiv(B_sub, tb)
    return tb, tb * n_tiles


def _vmem_limit(footprint_bytes: int) -> int:
    return int(min(max(int(1.5 * footprint_bytes) + (4 << 20), MIN_VMEM_LIMIT),
                   MAX_VMEM_LIMIT))


# ----------------------------------------------------------------------------
# One fused pallas_call over a contiguous layer group.
# ----------------------------------------------------------------------------
def _fused_call(xp, wbs, dims_p, tb, out_dtype, final_sigmoid):
    B_pad = xp.shape[0]
    num_layers = len(wbs)
    grid = (B_pad // tb,)

    in_specs = [pl.BlockSpec((tb, dims_p[0]), lambda i: (i, 0))]
    for l in range(num_layers):
        # Grid-invariant params: single-buffer (double-buffering buys nothing).
        in_specs.append(pl.BlockSpec((dims_p[l], dims_p[l + 1]), lambda i: (0, 0),
                                     pipeline_mode=pl.Buffered(1)))
        in_specs.append(pl.BlockSpec((1, dims_p[l + 1]), lambda i: (0, 0),
                                     pipeline_mode=pl.Buffered(1)))
    out_specs = pl.BlockSpec((tb, dims_p[-1]), lambda i: (i, 0))

    flat_params = [a for wb in wbs for a in wb]

    csize = xp.dtype.itemsize
    osize = jnp.dtype(out_dtype).itemsize
    param_bytes = sum(a.shape[0] * a.shape[1] * a.dtype.itemsize for a in flat_params)
    max_dp = max(dims_p)
    per_row = 2 * dims_p[0] * csize + 2 * dims_p[-1] * osize + 2 * max_dp * 4
    footprint = param_bytes + per_row * tb

    flops = sum(2 * B_pad * dims_p[l] * dims_p[l + 1] for l in range(num_layers))
    n_sig_layers = num_layers if final_sigmoid else num_layers - 1
    transcendentals = B_pad * sum(dims_p[l + 1] for l in range(n_sig_layers))
    bytes_accessed = (B_pad * dims_p[0] * csize + param_bytes
                      + B_pad * dims_p[-1] * osize)

    return pl.pallas_call(
        functools.partial(_fused_mlp_kernel, num_layers=num_layers,
                          final_sigmoid=final_sigmoid),
        out_shape=jax.ShapeDtypeStruct((B_pad, dims_p[-1]), out_dtype),
        grid=grid,
        in_specs=in_specs,
        out_specs=out_specs,
        compiler_params=pltpu.CompilerParams(
            dimension_semantics=("parallel",),       # shard batch tiles across TCs
            vmem_limit_bytes=_vmem_limit(footprint),
        ),
        cost_estimate=pl.CostEstimate(
            flops=flops,
            transcendentals=transcendentals,
            bytes_accessed=bytes_accessed,
        ),
    )(xp, *flat_params)


# ----------------------------------------------------------------------------
# Forward pass of MlpNet: sigmoid after every layer except the last.
# ----------------------------------------------------------------------------
def mlp_net_forward(x, prepared: PreparedMlp):
    B, D0 = x.shape
    dims, dims_p = prepared.dims, prepared.dims_p
    assert D0 == dims[0]
    cdt = prepared.compute_dtype
    sub = _sublane(cdt)
    out_dtype = x.dtype

    csize = jnp.dtype(cdt).itemsize
    osize = jnp.dtype(out_dtype).itemsize
    max_dp = max(dims_p)
    per_row = 2 * max_dp * csize + 2 * max_dp * osize + 2 * max_dp * 4
    max_group_params = max(_group_param_bytes(prepared, lo, hi)
                           for (lo, hi) in prepared.groups)
    tb, B_pad = _choose_batch_tile(B, sub, per_row, max_group_params)

    # Pad/cast input; aligned inputs skip the extra HBM pass entirely.
    if B_pad == B and dims_p[0] == D0 and x.dtype == cdt:
        h = x
    else:
        h = jnp.pad(x.astype(cdt), ((0, B_pad - B), (0, dims_p[0] - D0)))

    n_groups = len(prepared.groups)
    for gi, (lo, hi) in enumerate(prepared.groups):
        is_last = gi == n_groups - 1
        h = _fused_call(
            h,
            prepared.wbs[lo:hi],
            prepared.dims_p[lo:hi + 1],
            tb,
            out_dtype=out_dtype if is_last else cdt,
            final_sigmoid=not is_last,
        )

    return h[:B, : dims[-1]]


# ----------------------------------------------------------------------------
# Parameter init mirroring nn.Linear default (uniform +/- 1/sqrt(fan_in)),
# with W already stored as (in_features, out_features).
# ----------------------------------------------------------------------------
def init_mlp_params(key, layer_sizes, input_size, dtype=jnp.float32):
    sizes = [input_size] + list(layer_sizes)
    params = []
    for l_id in range(len(sizes) - 1):
        fan_in, fan_out = sizes[l_id], sizes[l_id + 1]
        key, kw, kb = jax.random.split(key, 3)
        bound = 1.0 / jnp.sqrt(fan_in)
        W = jax.random.uniform(kw, (fan_in, fan_out), dtype, -bound, bound)
        b = jax.random.uniform(kb, (fan_out,), dtype, -bound, bound)
        params.append((W, b))
    return params


def _reference_forward(x, params):
    h = x
    for i, (W, b) in enumerate(params):
        h = h @ W + b
        if i != len(params) - 1:
            h = jax.nn.sigmoid(h)
    return h


if __name__ == "__main__":
    key = jax.random.PRNGKey(0)
    kx, kp, kx2, kp2 = jax.random.split(key, 4)

    # Case 1: canonical shapes, f32 compute (tight tolerance).
    batch = 8
    input_size = 32
    layer_sizes = [64, 48, 16]  # last layer has no sigmoid

    x = jax.random.normal(kx, (batch, input_size), jnp.float32)
    params = init_mlp_params(kp, layer_sizes, input_size)
    ref = _reference_forward(x, params)

    prep_f32 = prepare_mlp_params(params, input_size, compute_dtype=jnp.float32)
    out_f32 = jax.block_until_ready(mlp_net_forward(x, prep_f32))
    assert out_f32.shape == (batch, layer_sizes[-1])
    assert out_f32.dtype == x.dtype
    assert jnp.allclose(out_f32, ref, atol=1e-5, rtol=1e-5)

    # Same network with bf16 MXU inputs / f32 accumulation (valid on v5e too).
    prep_bf16 = prepare_mlp_params(params, input_size, compute_dtype=jnp.bfloat16)
    out_bf16 = jax.block_until_ready(mlp_net_forward(x, prep_bf16))
    assert out_bf16.shape == (batch, layer_sizes[-1])
    assert jnp.allclose(out_bf16, ref, atol=2e-2, rtol=2e-2)

    # Case 2: ragged shapes exercising the lane/batch padding + slicing path.
    batch2, input_size2 = 5, 20
    layer_sizes2 = [33, 17, 10]
    x2 = jax.random.normal(kx2, (batch2, input_size2), jnp.float32)
    params2 = init_mlp_params(kp2, layer_sizes2, input_size2)
    prep2 = prepare_mlp_params(params2, input_size2, compute_dtype=jnp.float32)
    out2 = jax.block_until_ready(mlp_net_forward(x2, prep2))
    ref2 = _reference_forward(x2, params2)
    assert out2.shape == (batch2, layer_sizes2[-1])
    assert jnp.allclose(out2, ref2, atol=1e-5, rtol=1e-5)

    print("KERNEL_OK")
</pallas_src>

<mosaic_0001>
module attributes {stable_mosaic.version = 11 : i64} {
  func.func @_fused_mlp_kernel(%arg0: i32, %arg1: memref<8x128xf32, #tpu.memory_space<vmem>>, %arg2: memref<128x128xf32, #tpu.memory_space<vmem>>, %arg3: memref<1x128xf32, #tpu.memory_space<vmem>>, %arg4: memref<128x128xf32, #tpu.memory_space<vmem>>, %arg5: memref<1x128xf32, #tpu.memory_space<vmem>>, %arg6: memref<128x128xf32, #tpu.memory_space<vmem>>, %arg7: memref<1x128xf32, #tpu.memory_space<vmem>>, %arg8: memref<8x128xf32, #tpu.memory_space<vmem>>) attributes {dimension_semantics = [#tpu.dimension_semantics<parallel>], iteration_bounds = array<i64: 1>, scalar_prefetch = 0 : i64, scratch_operands = 0 : i64, tpu.core_type = #tpu.core_type<tc>, window_params = [{transform_indices = @transform_0, window_bounds = array<i64: 8, 128>}, {pipeline_mode = #tpu.pipeline_mode<synchronous>, transform_indices = @transform_1, window_bounds = array<i64: 128, 128>}, {pipeline_mode = #tpu.pipeline_mode<synchronous>, transform_indices = @transform_2, window_bounds = array<i64: 1, 128>}, {pipeline_mode = #tpu.pipeline_mode<synchronous>, transform_indices = @transform_3, window_bounds = array<i64: 128, 128>}, {pipeline_mode = #tpu.pipeline_mode<synchronous>, transform_indices = @transform_4, window_bounds = array<i64: 1, 128>}, {pipeline_mode = #tpu.pipeline_mode<synchronous>, transform_indices = @transform_5, window_bounds = array<i64: 128, 128>}, {pipeline_mode = #tpu.pipeline_mode<synchronous>, transform_indices = @transform_6, window_bounds = array<i64: 1, 128>}, {transform_indices = @transform_7, window_bounds = array<i64: 8, 128>}]} {
    %c0 = arith.constant 0 : index
    %c0_0 = arith.constant 0 : index
    %0 = vector.load %arg1[%c0, %c0_0] : memref<8x128xf32, #tpu.memory_space<vmem>>, vector<8x128xf32>
    %c0_1 = arith.constant 0 : index
    %c0_2 = arith.constant 0 : index
    %1 = vector.load %arg2[%c0_1, %c0_2] : memref<128x128xf32, #tpu.memory_space<vmem>>, vector<128x128xf32>
    %c0_3 = arith.constant 0 : index
    %c0_4 = arith.constant 0 : index
    %2 = vector.load %arg3[%c0_3, %c0_4] : memref<1x128xf32, #tpu.memory_space<vmem>>, vector<1x128xf32>
    %cst = arith.constant dense<0.000000e+00> : vector<8x128xf32>
    %3 = tpu.matmul %0, %1, %cst {dimension_numbers = #tpu.dot_dimension_numbers<[1], [0], [0], [1], [0, 0, 1, 1], [], []>} : vector<8x128xf32>, vector<128x128xf32>, vector<8x128xf32> -> vector<8x128xf32>
    %4 = vector.broadcast %2 : vector<1x128xf32> to vector<8x128xf32>
    %5 = arith.addf %3, %4 : vector<8x128xf32>
    %6 = arith.negf %5 : vector<8x128xf32>
    %7 = math.exp %6 : vector<8x128xf32>
    %cst_5 = arith.constant 1.000000e+00 : f32
    %8 = vector.broadcast %cst_5 : f32 to vector<8x128xf32>
    %9 = arith.addf %8, %7 : vector<8x128xf32>
    %10 = arith.divf %8, %9 : vector<8x128xf32>
    %c0_6 = arith.constant 0 : index
    %c0_7 = arith.constant 0 : index
    %11 = vector.load %arg4[%c0_6, %c0_7] : memref<128x128xf32, #tpu.memory_space<vmem>>, vector<128x128xf32>
    %c0_8 = arith.constant 0 : index
    %c0_9 = arith.constant 0 : index
    %12 = vector.load %arg5[%c0_8, %c0_9] : memref<1x128xf32, #tpu.memory_space<vmem>>, vector<1x128xf32>
    %cst_10 = arith.constant dense<0.000000e+00> : vector<8x128xf32>
    %13 = tpu.matmul %10, %11, %cst_10 {dimension_numbers = #tpu.dot_dimension_numbers<[1], [0], [0], [1], [0, 0, 1, 1], [], []>} : vector<8x128xf32>, vector<128x128xf32>, vector<8x128xf32> -> vector<8x128xf32>
    %14 = vector.broadcast %12 : vector<1x128xf32> to vector<8x128xf32>
    %15 = arith.addf %13, %14 : vector<8x128xf32>
    %16 = arith.negf %15 : vector<8x128xf32>
    %17 = math.exp %16 : vector<8x128xf32>
    %cst_11 = arith.constant 1.000000e+00 : f32
    %18 = vector.broadcast %cst_11 : f32 to vector<8x128xf32>
    %19 = arith.addf %18, %17 : vector<8x128xf32>
    %20 = arith.divf %18, %19 : vector<8x128xf32>
    %c0_12 = arith.constant 0 : index
    %c0_13 = arith.constant 0 : index
    %21 = vector.load %arg6[%c0_12, %c0_13] : memref<128x128xf32, #tpu.memory_space<vmem>>, vector<128x128xf32>
    %c0_14 = arith.constant 0 : index
    %c0_15 = arith.constant 0 : index
    %22 = vector.load %arg7[%c0_14, %c0_15] : memref<1x128xf32, #tpu.memory_space<vmem>>, vector<1x128xf32>
    %cst_16 = arith.constant dense<0.000000e+00> : vector<8x128xf32>
    %23 = tpu.matmul %20, %21, %cst_16 {dimension_numbers = #tpu.dot_dimension_numbers<[1], [0], [0], [1], [0, 0, 1, 1], [], []>} : vector<8x128xf32>, vector<128x128xf32>, vector<8x128xf32> -> vector<8x128xf32>
    %24 = vector.broadcast %22 : vector<1x128xf32> to vector<8x128xf32>
    %25 = arith.addf %23, %24 : vector<8x128xf32>
    %c0_17 = arith.constant 0 : index
    %c0_18 = arith.constant 0 : index
    %26 = vector.load %arg8[%c0_17, %c0_18] : memref<8x128xf32, #tpu.memory_space<vmem>>, vector<8x128xf32>
    tpu.vector_store %arg8[%c0_17, %c0_18], %25 {strides = array<i32>} : memref<8x128xf32, #tpu.memory_space<vmem>>, vector<8x128xf32>,
    return
  }
  func.func @transform_0(%arg0: i32) -> (i32, i32) {
    %c0_i32 = arith.constant 0 : i32
    %c0_i32_0 = arith.constant 0 : i32
    return %arg0, %c0_i32 : i32, i32
  }
  func.func @transform_1(%arg0: i32) -> (i32, i32) {
    %c0_i32 = arith.constant 0 : i32
    %c0_i32_0 = arith.constant 0 : i32
    %c0_i32_1 = arith.constant 0 : i32
    return %c0_i32, %c0_i32_0 : i32, i32
  }
  func.func @transform_2(%arg0: i32) -> (i32, i32) {
    %c0_i32 = arith.constant 0 : i32
    %c0_i32_0 = arith.constant 0 : i32
    %c0_i32_1 = arith.constant 0 : i32
    return %c0_i32, %c0_i32_0 : i32, i32
  }
  func.func @transform_3(%arg0: i32) -> (i32, i32) {
    %c0_i32 = arith.constant 0 : i32
    %c0_i32_0 = arith.constant 0 : i32
    %c0_i32_1 = arith.constant 0 : i32
    return %c0_i32, %c0_i32_0 : i32, i32
  }
  func.func @transform_4(%arg0: i32) -> (i32, i32) {
    %c0_i32 = arith.constant 0 : i32
    %c0_i32_0 = arith.constant 0 : i32
    %c0_i32_1 = arith.constant 0 : i32
    return %c0_i32, %c0_i32_0 : i32, i32
  }
  func.func @transform_5(%arg0: i32) -> (i32, i32) {
    %c0_i32 = arith.constant 0 : i32
    %c0_i32_0 = arith.constant 0 : i32
    %c0_i32_1 = arith.constant 0 : i32
    return %c0_i32, %c0_i32_0 : i32, i32
  }
  func.func @transform_6(%arg0: i32) -> (i32, i32) {
    %c0_i32 = arith.constant 0 : i32
    %c0_i32_0 = arith.constant 0 : i32
    %c0_i32_1 = arith.constant 0 : i32
    return %c0_i32, %c0_i32_0 : i32, i32
  }
  func.func @transform_7(%arg0: i32) -> (i32, i32) {
    %c0_i32 = arith.constant 0 : i32
    %c0_i32_0 = arith.constant 0 : i32
    return %arg0, %c0_i32 : i32, i32
  }
}

</mosaic_0001>

<llo_original>
// kernel: tpu_custom_call.1
$region0: #{tpu_custom_call.1}
  #allocation0 [shape = 'u32[]', space=smem, size = 0x4, offset = 0x4, fixed_abs, tag = 'smem constant byte address 0x4 - core index']
  #allocation1 [shape = 'u32[144,128]{1,0:T(1,128)}', space=vmem, size = 0x12000, scoped, tag = 'internal scratch']
  %s0 = inlined_call_operand.hbm [shape: f32[8,128], index: 0, kind: input, shape index: {}]
  %s1 = inlined_call_operand.hbm [shape: f32[128,128], index: 1, kind: input, shape index: {}]
  %s2 = inlined_call_operand.vmem [shape: f32[1,128], index: 2, kind: input, shape index: {}]
  %s3 = inlined_call_operand.hbm [shape: f32[128,128], index: 3, kind: input, shape index: {}]
  %s4 = inlined_call_operand.vmem [shape: f32[1,128], index: 4, kind: input, shape index: {}]
  %s5 = inlined_call_operand.hbm [shape: f32[128,128], index: 5, kind: input, shape index: {}]
  %s6 = inlined_call_operand.vmem [shape: f32[1,128], index: 6, kind: input, shape index: {}]
  %s7 = inlined_call_operand.hbm [shape: f32[8,128], index: 7, kind: output, shape index: {}]
  %s8 = sld [smem:[#allocation0]]
  $region54: #{tpu_custom_call.1} parent=0
    _
  %s10 = ssub.s32 1, %s8
  %s11 = scalar_select 0, %s10, %s8
  $region1: #{tpu_custom_call.1} parent=0
    #allocation2 [shape = 'u8[4096]{0}', space=vmem, size = 0x1000, scoped, tag = 'input window, operand 0, single buffered']
    #allocation3 [shape = 's32[1]{0}', space=sflag, size = 0x4, scoped, tag = 'scoped memory for tpu_custom_call.1']
    #allocation4 [shape = 's32[1]{0}', space=sflag, size = 0x4, scoped, tag = 'scoped memory for tpu_custom_call.1']
    #allocation5 [shape = 'u8[65536]{0}', space=vmem, size = 0x10000, scoped, tag = 'input window, operand 1, single buffered']
    #allocation6 [shape = 's32[1]{0}', space=sflag, size = 0x4, scoped, tag = 'scoped memory for tpu_custom_call.1']
    #allocation7 [shape = 'u8[65536]{0}', space=vmem, size = 0x10000, scoped, tag = 'input window, operand 3, single buffered']
    #allocation8 [shape = 'u8[65536]{0}', space=vmem, size = 0x10000, scoped, tag = 'input window, operand 5, single buffered']
    #allocation9 [shape = 's32[1]{0}', space=sflag, size = 0x4, scoped, tag = 'scoped memory for tpu_custom_call.1']
    #allocation10 [shape = 'u8[4096]{0}', space=vmem, size = 0x1000, scoped, tag = 'output window, operand 0, single buffered']
    %12 = vsyncpa [#allocation3], 0
    %13 = vsyncpa [#allocation6], 0
    %14 = vsyncpa [#allocation9], 0
    %15 = vsyncpa [#allocation4], 0
    // Predicated region
    $region2: #{tpu_custom_call.1} parent=1 // pred_check
      _
    $region3: #{tpu_custom_call.1} parent=1 // pred_check_branch
      %17 = sbr.rel (0) target = $region5
    $region4: #{tpu_custom_call.1} parent=1 // pred_region
      %s19 = ssub.s32 128, 128
      %20 = vsyncadd [#allocation3], %s19
      %s22 = sshll.u32 [#allocation2], 4
      %s23 = int_to_ptr.vmem [resolvable:$true] %s22
      %25 = dma.hbm_to_vmem [thread:$0]  %s0, 128, %s23, [#allocation3]
    $region5: #{tpu_custom_call.1} parent=1 // pred_fallthru
      _
    // Predicated region
    $region6: #{tpu_custom_call.1} parent=1 // pred_check
      _
    $region7: #{tpu_custom_call.1} parent=1 // pred_check_branch
      %27 = sbr.rel (0) target = $region9
    $region8: #{tpu_custom_call.1} parent=1 // pred_region
      %s29 = ssub.s32 2048, 2048
      %30 = vsyncadd [#allocation6], %s29
      %s31 = sshll.u32 [#allocation5], 4
      %s32 = int_to_ptr.vmem [resolvable:$true] %s31
      %37 = dma.hbm_to_vmem [thread:$0]  %s1, 2048, %s32, [#allocation6], 128, 128, 8
    $region9: #{tpu_custom_call.1} parent=1 // pred_fallthru
      _
    // Predicated region
    $region10: #{tpu_custom_call.1} parent=1 // pred_check
      _
    $region11: #{tpu_custom_call.1} parent=1 // pred_check_branch
      %39 = sbr.rel (0) target = $region13
    $region12: #{tpu_custom_call.1} parent=1 // pred_region
      _
    $region13: #{tpu_custom_call.1} parent=1 // pred_fallthru
      _
    // Predicated region
    $region14: #{tpu_custom_call.1} parent=1 // pred_check
      _
    $region15: #{tpu_custom_call.1} parent=1 // pred_check_branch
      %41 = sbr.rel (0) target = $region17
    $region16: #{tpu_custom_call.1} parent=1 // pred_region
      %s43 = ssub.s32 2048, 2048
      %44 = vsyncadd [#allocation6], %s43
      %s45 = sshll.u32 [#allocation7], 4
      %s46 = int_to_ptr.vmem [resolvable:$true] %s45
      %51 = dma.hbm_to_vmem [thread:$0]  %s3, 2048, %s46, [#allocation6], 128, 128, 8
    $region17: #{tpu_custom_call.1} parent=1 // pred_fallthru
      _
    // Predicated region
    $region18: #{tpu_custom_call.1} parent=1 // pred_check
      _
    $region19: #{tpu_custom_call.1} parent=1 // pred_check_branch
      %53 = sbr.rel (0) target = $region21
    $region20: #{tpu_custom_call.1} parent=1 // pred_region
      _
    $region21: #{tpu_custom_call.1} parent=1 // pred_fallthru
      _
    // Predicated region
    $region22: #{tpu_custom_call.1} parent=1 // pred_check
      _
    $region23: #{tpu_custom_call.1} parent=1 // pred_check_branch
      %55 = sbr.rel (0) target = $region25
    $region24: #{tpu_custom_call.1} parent=1 // pred_region
      %s57 = ssub.s32 2048, 2048
      %58 = vsyncadd [#allocation9], %s57
      %s59 = sshll.u32 [#allocation8], 4
      %s60 = int_to_ptr.vmem [resolvable:$true] %s59
      %65 = dma.hbm_to_vmem [thread:$0]  %s5, 2048, %s60, [#allocation9], 128, 128, 8
    $region25: #{tpu_custom_call.1} parent=1 // pred_fallthru
      _
    // Predicated region
    $region26: #{tpu_custom_call.1} parent=1 // pred_check
      _
    $region27: #{tpu_custom_call.1} parent=1 // pred_check_branch
      %67 = sbr.rel (0) target = $region29
    $region28: #{tpu_custom_call.1} parent=1 // pred_region
      _
    $region29: #{tpu_custom_call.1} parent=1 // pred_fallthru
      _
    // Predicated region
    $region30: #{tpu_custom_call.1} parent=1 // pred_check
      _
    $region31: #{tpu_custom_call.1} parent=1 // pred_check_branch
      %69 = sbr.rel (0) target = $region33
    $region32: #{tpu_custom_call.1} parent=1 // pred_region
      %70 = dma.done [#allocation3], 128
    $region33: #{tpu_custom_call.1} parent=1 // pred_fallthru
      _
    // Predicated region
    $region34: #{tpu_custom_call.1} parent=1 // pred_check
      _
    $region35: #{tpu_custom_call.1} parent=1 // pred_check_branch
      %72 = sbr.rel (0) target = $region37
    $region36: #{tpu_custom_call.1} parent=1 // pred_region
      %73 = dma.done [#allocation6], 2048
    $region37: #{tpu_custom_call.1} parent=1 // pred_fallthru
      _
    // Predicated region
    $region38: #{tpu_custom_call.1} parent=1 // pred_check
      _
    $region39: #{tpu_custom_call.1} parent=1 // pred_check_branch
      %75 = sbr.rel (0) target = $region41
    $region40: #{tpu_custom_call.1} parent=1 // pred_region
      %76 = dma.done [#allocation6], 2048
    $region41: #{tpu_custom_call.1} parent=1 // pred_fallthru
      _
    // Predicated region
    $region42: #{tpu_custom_call.1} parent=1 // pred_check
      _
    $region43: #{tpu_custom_call.1} parent=1 // pred_check_branch
      %78 = sbr.rel (0) target = $region45
    $region44: #{tpu_custom_call.1} parent=1 // pred_region
      %79 = dma.done [#allocation9], 2048
    $region45: #{tpu_custom_call.1} parent=1 // pred_fallthru
      _
    %v80 = vld [vmem:[#allocation2] sm:$0xff]
    %v81 = vld [vmem:[#allocation5] sm:$0xff]
    %v82 = vld [vmem:[#allocation5 + $0x8] sm:$0xff]
    %v83 = vld [vmem:[#allocation5 + $0x10] sm:$0xff]
    %v84 = vld [vmem:[#allocation5 + $0x18] sm:$0xff]
    %v85 = vld [vmem:[#allocation5 + $0x20] sm:$0xff]
    %v86 = vld [vmem:[#allocation5 + $0x28] sm:$0xff]
    %v87 = vld [vmem:[#allocation5 + $0x30] sm:$0xff]
    %v88 = vld [vmem:[#allocation5 + $0x38] sm:$0xff]
    %v89 = vld [vmem:[#allocation5 + $0x40] sm:$0xff]
    %v90 = vld [vmem:[#allocation5 + $0x48] sm:$0xff]
    %v91 = vld [vmem:[#allocation5 + $0x50] sm:$0xff]
    %v92 = vld [vmem:[#allocation5 + $0x58] sm:$0xff]
    %v93 = vld [vmem:[#allocation5 + $0x60] sm:$0xff]
    %v94 = vld [vmem:[#allocation5 + $0x68] sm:$0xff]
    %v95 = vld [vmem:[#allocation5 + $0x70] sm:$0xff]
    %v96 = vld [vmem:[#allocation5 + $0x78] sm:$0xff]
    %v97 = vld [vmem:[%s2] sm:$0x1]
    %v99 = vlaneseq
    %v100 = vshrl.u32 %v99, 7
    %v101 = vsub.s32 0, %v100
    %v102 = vrot.slane %v97, %v101
    %104 = vmatprep.subr.mxu0 0.0
    %105 = vmatpush1.msra.mxu0 %v96
    %106 = vmatprep.subr.mxu0 0.0
    %107 = vmatpush1.msra.mxu0 %v95
    %108 = vmatprep.subr.mxu0 0.0
    %109 = vmatpush1.msra.mxu0 %v94
    %110 = vmatprep.subr.mxu0 0.0
    %111 = vmatpush1.msra.mxu0 %v93
    %112 = vmatprep.subr.mxu0 0.0
    %113 = vmatpush1.msra.mxu0 %v92
    %114 = vmatprep.subr.mxu0 0.0
    %115 = vmatpush1.msra.mxu0 %v91
    %116 = vmatprep.subr.mxu0 0.0
    %117 = vmatpush1.msra.mxu0 %v90
    %118 = vmatprep.subr.mxu0 0.0
    %119 = vmatpush1.msra.mxu0 %v89
    %120 = vmatprep.subr.mxu0 0.0
    %121 = vmatpush1.msra.mxu0 %v88
    %122 = vmatprep.subr.mxu0 0.0
    %123 = vmatpush1.msra.mxu0 %v87
    %124 = vmatprep.subr.mxu0 0.0
    %125 = vmatpush1.msra.mxu0 %v86
    %126 = vmatprep.subr.mxu0 0.0
    %127 = vmatpush1.msra.mxu0 %v85
    %128 = vmatprep.subr.mxu0 0.0
    %129 = vmatpush1.msra.mxu0 %v84
    %130 = vmatprep.subr.mxu0 0.0
    %131 = vmatpush1.msra.mxu0 %v83
    %132 = vmatprep.subr.mxu0 0.0
    %133 = vmatpush1.msra.mxu0 %v82
    %134 = vmatprep.subr.mxu0 0.0
    %135 = vmatpush1.msra.mxu0 %v81
    %136 = vmatprep.subr.mxu0 0.0
    %137 = vmatpush2.msra.mxu0 0.0
    %138 = vmatprep.subr.mxu0 0.0
    %139 = vmatpush2.msra.mxu0 0.0
    %140 = vmatprep.subr.mxu0 0.0
    %141 = vmatpush2.msra.mxu0 0.0
    %142 = vmatprep.subr.mxu0 0.0
    %143 = vmatpush2.msra.mxu0 0.0
    %144 = vmatprep.subr.mxu0 0.0
    %145 = vmatpush2.msra.mxu0 0.0
    %146 = vmatprep.subr.mxu0 0.0
    %147 = vmatpush2.msra.mxu0 0.0
    %148 = vmatprep.subr.mxu0 0.0
    %149 = vmatpush2.msra.mxu0 0.0
    %150 = vmatprep.subr.mxu0 0.0
    %151 = vmatpush2.msra.mxu0 0.0
    %152 = vmatprep.subr.mxu0 0.0
    %153 = vmatpush2.msra.mxu0 0.0
    %154 = vmatprep.subr.mxu0 0.0
    %155 = vmatpush2.msra.mxu0 0.0
    %156 = vmatprep.subr.mxu0 0.0
    %157 = vmatpush2.msra.mxu0 0.0
    %158 = vmatprep.subr.mxu0 0.0
    %159 = vmatpush2.msra.mxu0 0.0
    %160 = vmatprep.subr.mxu0 0.0
    %161 = vmatpush2.msra.mxu0 0.0
    %162 = vmatprep.subr.mxu0 0.0
    %163 = vmatpush2.msra.mxu0 0.0
    %164 = vmatprep.subr.mxu0 0.0
    %165 = vmatpush2.msra.mxu0 0.0
    %166 = vmatprep.subr.mxu0 0.0
    %167 = vmatpush2.msra.mxu0 0.0
    %168 = vmatprep.mubr.f32.mxu0 0.0
    %169 = vmatmul.mubr.f32.gmra.mxu0 %v80
    %v170 = vpop.f32.mrf.mxu0
    %v171 = vadd.f32 %v102, %v170
    %v172 = vpop.f32.mrf.mxu0
    %173 = vdwg.mxu0
    %v174 = vxor.u32 %v171, 2147483648
    %v175 = vmul.f32 %v174, 1.442695
    %v176 = vpow.pop %v175
    %v177 = vadd.f32 %v176, 1.0
    %v178 = vrcp.pop %v177
    %v179 = vmul.f32 1.0, %v178
    %v180 = vld [vmem:[#allocation7] sm:$0xff]
    %v181 = vld [vmem:[#allocation7 + $0x8] sm:$0xff]
    %v182 = vld [vmem:[#allocation7 + $0x10] sm:$0xff]
    %v183 = vld [vmem:[#allocation7 + $0x18] sm:$0xff]
    %v184 = vld [vmem:[#allocation7 + $0x20] sm:$0xff]
    %v185 = vld [vmem:[#allocation7 + $0x28] sm:$0xff]
    %v186 = vld [vmem:[#allocation7 + $0x30] sm:$0xff]
    %v187 = vld [vmem:[#allocation7 + $0x38] sm:$0xff]
    %v188 = vld [vmem:[#allocation7 + $0x40] sm:$0xff]
    %v189 = vld [vmem:[#allocation7 + $0x48] sm:$0xff]
    %v190 = vld [vmem:[#allocation7 + $0x50] sm:$0xff]
    %v191 = vld [vmem:[#allocation7 + $0x58] sm:$0xff]
    %v192 = vld [vmem:[#allocation7 + $0x60] sm:$0xff]
    %v193 = vld [vmem:[#allocation7 + $0x68] sm:$0xff]
    %v194 = vld [vmem:[#allocation7 + $0x70] sm:$0xff]
    %v195 = vld [vmem:[#allocation7 + $0x78] sm:$0xff]
    %v196 = vld [vmem:[%s4] sm:$0x1]
    %v198 = vlaneseq
    %v199 = vshrl.u32 %v198, 7
    %v200 = vsub.s32 0, %v199
    %v201 = vrot.slane %v196, %v200
    %203 = vmatprep.subr.mxu0 0.0
    %204 = vmatpush1.msra.mxu0 %v195
    %205 = vmatprep.subr.mxu0 0.0
    %206 = vmatpush1.msra.mxu0 %v194
    %207 = vmatprep.subr.mxu0 0.0
    %208 = vmatpush1.msra.mxu0 %v193
    %209 = vmatprep.subr.mxu0 0.0
    %210 = vmatpush1.msra.mxu0 %v192
    %211 = vmatprep.subr.mxu0 0.0
    %212 = vmatpush1.msra.mxu0 %v191
    %213 = vmatprep.subr.mxu0 0.0
    %214 = vmatpush1.msra.mxu0 %v190
    %215 = vmatprep.subr.mxu0 0.0
    %216 = vmatpush1.msra.mxu0 %v189
    %217 = vmatprep.subr.mxu0 0.0
    %218 = vmatpush1.msra.mxu0 %v188
    %219 = vmatprep.subr.mxu0 0.0
    %220 = vmatpush1.msra.mxu0 %v187
    %221 = vmatprep.subr.mxu0 0.0
    %222 = vmatpush1.msra.mxu0 %v186
    %223 = vmatprep.subr.mxu0 0.0
    %224 = vmatpush1.msra.mxu0 %v185
    %225 = vmatprep.subr.mxu0 0.0
    %226 = vmatpush1.msra.mxu0 %v184
    %227 = vmatprep.subr.mxu0 0.0
    %228 = vmatpush1.msra.mxu0 %v183
    %229 = vmatprep.subr.mxu0 0.0
    %230 = vmatpush1.msra.mxu0 %v182
    %231 = vmatprep.subr.mxu0 0.0
    %232 = vmatpush1.msra.mxu0 %v181
    %233 = vmatprep.subr.mxu0 0.0
    %234 = vmatpush1.msra.mxu0 %v180
    %235 = vmatprep.subr.mxu0 0.0
    %236 = vmatpush2.msra.mxu0 0.0
    %237 = vmatprep.subr.mxu0 0.0
    %238 = vmatpush2.msra.mxu0 0.0
    %239 = vmatprep.subr.mxu0 0.0
    %240 = vmatpush2.msra.mxu0 0.0
    %241 = vmatprep.subr.mxu0 0.0
    %242 = vmatpush2.msra.mxu0 0.0
    %243 = vmatprep.subr.mxu0 0.0
    %244 = vmatpush2.msra.mxu0 0.0
    %245 = vmatprep.subr.mxu0 0.0
    %246 = vmatpush2.msra.mxu0 0.0
    %247 = vmatprep.subr.mxu0 0.0
    %248 = vmatpush2.msra.mxu0 0.0
    %249 = vmatprep.subr.mxu0 0.0
    %250 = vmatpush2.msra.mxu0 0.0
    %251 = vmatprep.subr.mxu0 0.0
    %252 = vmatpush2.msra.mxu0 0.0
    %253 = vmatprep.subr.mxu0 0.0
    %254 = vmatpush2.msra.mxu0 0.0
    %255 = vmatprep.subr.mxu0 0.0
    %256 = vmatpush2.msra.mxu0 0.0
    %257 = vmatprep.subr.mxu0 0.0
    %258 = vmatpush2.msra.mxu0 0.0
    %259 = vmatprep.subr.mxu0 0.0
    %260 = vmatpush2.msra.mxu0 0.0
    %261 = vmatprep.subr.mxu0 0.0
    %262 = vmatpush2.msra.mxu0 0.0
    %263 = vmatprep.subr.mxu0 0.0
    %264 = vmatpush2.msra.mxu0 0.0
    %265 = vmatprep.subr.mxu0 0.0
    %266 = vmatpush2.msra.mxu0 0.0
    %267 = vmatprep.mubr.f32.mxu0 0.0
    %268 = vmatmul.mubr.f32.gmra.mxu0 %v179
    %v269 = vpop.f32.mrf.mxu0
    %v270 = vadd.f32 %v201, %v269
    %v271 = vpop.f32.mrf.mxu0
    %272 = vdwg.mxu0
    %v273 = vxor.u32 %v270, 2147483648
    %v274 = vmul.f32 %v273, 1.442695
    %v275 = vpow.pop %v274
    %v276 = vadd.f32 %v275, 1.0
    %v277 = vrcp.pop %v276
    %v278 = vmul.f32 1.0, %v277
    %v279 = vld [vmem:[#allocation8] sm:$0xff]
    %v280 = vld [vmem:[#allocation8 + $0x8] sm:$0xff]
    %v281 = vld [vmem:[#allocation8 + $0x10] sm:$0xff]
    %v282 = vld [vmem:[#allocation8 + $0x18] sm:$0xff]
    %v283 = vld [vmem:[#allocation8 + $0x20] sm:$0xff]
    %v284 = vld [vmem:[#allocation8 + $0x28] sm:$0xff]
    %v285 = vld [vmem:[#allocation8 + $0x30] sm:$0xff]
    %v286 = vld [vmem:[#allocation8 + $0x38] sm:$0xff]
    %v287 = vld [vmem:[#allocation8 + $0x40] sm:$0xff]
    %v288 = vld [vmem:[#allocation8 + $0x48] sm:$0xff]
    %v289 = vld [vmem:[#allocation8 + $0x50] sm:$0xff]
    %v290 = vld [vmem:[#allocation8 + $0x58] sm:$0xff]
    %v291 = vld [vmem:[#allocation8 + $0x60] sm:$0xff]
    %v292 = vld [vmem:[#allocation8 + $0x68] sm:$0xff]
    %v293 = vld [vmem:[#allocation8 + $0x70] sm:$0xff]
    %v294 = vld [vmem:[#allocation8 + $0x78] sm:$0xff]
    %v295 = vld [vmem:[%s6] sm:$0x1]
    %v297 = vlaneseq
    %v298 = vshrl.u32 %v297, 7
    %v299 = vsub.s32 0, %v298
    %v300 = vrot.slane %v295, %v299
    %302 = vmatprep.subr.mxu0 0.0
    %303 = vmatpush1.msra.mxu0 %v294
    %304 = vmatprep.subr.mxu0 0.0
    %305 = vmatpush1.msra.mxu0 %v293
    %306 = vmatprep.subr.mxu0 0.0
    %307 = vmatpush1.msra.mxu0 %v292
    %308 = vmatprep.subr.mxu0 0.0
    %309 = vmatpush1.msra.mxu0 %v291
    %310 = vmatprep.subr.mxu0 0.0
    %311 = vmatpush1.msra.mxu0 %v290
    %312 = vmatprep.subr.mxu0 0.0
    %313 = vmatpush1.msra.mxu0 %v289
    %314 = vmatprep.subr.mxu0 0.0
    %315 = vmatpush1.msra.mxu0 %v288
    %316 = vmatprep.subr.mxu0 0.0
    %317 = vmatpush1.msra.mxu0 %v287
    %318 = vmatprep.subr.mxu0 0.0
    %319 = vmatpush1.msra.mxu0 %v286
    %320 = vmatprep.subr.mxu0 0.0
    %321 = vmatpush1.msra.mxu0 %v285
    %322 = vmatprep.subr.mxu0 0.0
    %323 = vmatpush1.msra.mxu0 %v284
    %324 = vmatprep.subr.mxu0 0.0
    %325 = vmatpush1.msra.mxu0 %v283
    %326 = vmatprep.subr.mxu0 0.0
    %327 = vmatpush1.msra.mxu0 %v282
    %328 = vmatprep.subr.mxu0 0.0
    %329 = vmatpush1.msra.mxu0 %v281
    %330 = vmatprep.subr.mxu0 0.0
    %331 = vmatpush1.msra.mxu0 %v280
    %332 = vmatprep.subr.mxu0 0.0
    %333 = vmatpush1.msra.mxu0 %v279
    %334 = vmatprep.subr.mxu0 0.0
    %335 = vmatpush2.msra.mxu0 0.0
    %336 = vmatprep.subr.mxu0 0.0
    %337 = vmatpush2.msra.mxu0 0.0
    %338 = vmatprep.subr.mxu0 0.0
    %339 = vmatpush2.msra.mxu0 0.0
    %340 = vmatprep.subr.mxu0 0.0
    %341 = vmatpush2.msra.mxu0 0.0
    %342 = vmatprep.subr.mxu0 0.0
    %343 = vmatpush2.msra.mxu0 0.0
    %344 = vmatprep.subr.mxu0 0.0
    %345 = vmatpush2.msra.mxu0 0.0
    %346 = vmatprep.subr.mxu0 0.0
    %347 = vmatpush2.msra.mxu0 0.0
    %348 = vmatprep.subr.mxu0 0.0
    %349 = vmatpush2.msra.mxu0 0.0
    %350 = vmatprep.subr.mxu0 0.0
    %351 = vmatpush2.msra.mxu0 0.0
    %352 = vmatprep.subr.mxu0 0.0
    %353 = vmatpush2.msra.mxu0 0.0
    %354 = vmatprep.subr.mxu0 0.0
    %355 = vmatpush2.msra.mxu0 0.0
    %356 = vmatprep.subr.mxu0 0.0
    %357 = vmatpush2.msra.mxu0 0.0
    %358 = vmatprep.subr.mxu0 0.0
    %359 = vmatpush2.msra.mxu0 0.0
    %360 = vmatprep.subr.mxu0 0.0
    %361 = vmatpush2.msra.mxu0 0.0
    %362 = vmatprep.subr.mxu0 0.0
    %363 = vmatpush2.msra.mxu0 0.0
    %364 = vmatprep.subr.mxu0 0.0
    %365 = vmatpush2.msra.mxu0 0.0
    %366 = vmatprep.mubr.f32.mxu0 0.0
    %367 = vmatmul.mubr.f32.gmra.mxu0 %v278
    %v368 = vpop.f32.mrf.mxu0
    %v369 = vadd.f32 %v300, %v368
    %v370 = vpop.f32.mrf.mxu0
    %371 = vdwg.mxu0
    %372 = vst [vmem:[#allocation10] sm:$0xff] %v369
    // Predicated region
    $region46: #{tpu_custom_call.1} parent=1 // pred_check
      _
    $region47: #{tpu_custom_call.1} parent=1 // pred_check_branch
      %374 = sbr.rel (0) target = $region49
    $region48: #{tpu_custom_call.1} parent=1 // pred_region
      %s376 = ssub.s32 128, 128
      %377 = vsyncadd [#allocation4], %s376
      %s379 = sshll.u32 [#allocation10], 4
      %s380 = int_to_ptr.vmem [resolvable:$true] %s379
      %382 = dma.vmem_to_hbm [thread:$0]  %s380, 128, %s7, [#allocation4]
    $region49: #{tpu_custom_call.1} parent=1 // pred_fallthru
      _
    // Predicated region
    $region50: #{tpu_custom_call.1} parent=1 // pred_check
      _
    $region51: #{tpu_custom_call.1} parent=1 // pred_check_branch
      %384 = sbr.rel (0) target = $region53
    $region52: #{tpu_custom_call.1} parent=1 // pred_region
      %385 = dma.done [#allocation4], 128
    $region53: #{tpu_custom_call.1} parent=1 // pred_fallthru
      _
    %386 = vsyncpa [#allocation3], 1
    %387 = vsyncpa [#allocation6], 1
    %388 = vsyncpa [#allocation9], 1
    %389 = vsyncpa [#allocation4], 1

</llo_original>
